<compile_context>
chip_gen: v7x
topology: tpu7x:2x2x1
jax: 0.10.0
libtpu: 0.0.40
codegen_flags: <defaults>
</compile_context>

<pallas_src>
import jax
import jax.numpy as jnp
from jax.experimental import pallas as pl
from jax.experimental.pallas import tpu as pltpu


def trunk_kernel(t_ref, w1_ref, b1_ref, w2_ref, b2_ref, o_ref):
    # t tile: (n, tb), batch on lanes. Cast up once (cheap VPU work in a mem-bound kernel,
    # also handles the optional bf16-streamed input).
    t = t_ref[...].astype(jnp.float32)
    # Layer 1: (hidden, n) @ (n, tb) -> (hidden, tb).  MXU is tiny here but not the bottleneck.
    h = jnp.dot(w1_ref[...], t, preferred_element_type=jnp.float32)
    h = jnp.maximum(h + b1_ref[...], 0.0)            # b1 (hidden, 1) broadcasts over batch lanes
    # Layer 2: (num_outputs, hidden) @ (hidden, tb) -> (num_outputs, tb).
    out = jnp.dot(w2_ref[...], h, preferred_element_type=jnp.float32)
    o_ref[...] = (out + b2_ref[...]).astype(o_ref.dtype)   # b2 (num_outputs, 1)


def _pick_batch_tile(B, block_b):
    """Lane tile for the batch axis: multiple of 128 (or the full dim), >=2 grid steps for
    medium/large B so the 'parallel' axis can actually use both TensorCores on v7x."""
    if B <= 256:
        return B                              # single full-dim block (legal for any B)
    half = -(-B // 2)                         # ceil(B / 2)  -> at least 2 grid steps
    half = -(-half // 128) * 128              # round up to 128 lanes
    return max(128, min(block_b, half))


def trunk_net(t, w1, b1, w2, b2, *, block_b=32768, stream_dtype=None):
    """Forward pass of TrunkNet.

    t:  (B, n) float32                     (same as the PyTorch module input)
    w1: (hidden, n), b1: (hidden, 1)       (PyTorch nn.Linear layout)
    w2: (num_outputs, hidden), b2: (num_outputs, 1)
    returns (B, num_outputs) float32.
    """
    B, n = t.shape
    hidden, n_w = w1.shape
    num_outputs = w2.shape[0]
    assert n_w == n and w2.shape[1] == hidden

    # Batch-on-lanes layout for the kernel (dense DMAs); transpose back at the end so the
    # external semantics match the PyTorch module.
    tt = t.T                                   # (n, B)
    if stream_dtype is not None:
        tt = tt.astype(stream_dtype)           # e.g. bf16 streaming: halves input HBM bytes

    tb = _pick_batch_tile(B, block_b)
    grid = (pl.cdiv(B, tb),)

    out_t = pl.pallas_call(
        trunk_kernel,
        out_shape=jax.ShapeDtypeStruct((num_outputs, B), jnp.float32),
        grid=grid,
        in_specs=[
            # Streamed batch tiles, lane-dense (last dim = batch tile).
            pl.BlockSpec((n, tb), lambda i: (0, i)),
            # Weights / biases: constant block index -> loaded once, VMEM-resident.
            pl.BlockSpec((hidden, n), lambda i: (0, 0)),
            pl.BlockSpec((hidden, 1), lambda i: (0, 0)),
            pl.BlockSpec((num_outputs, hidden), lambda i: (0, 0)),
            pl.BlockSpec((num_outputs, 1), lambda i: (0, 0)),
        ],
        out_specs=pl.BlockSpec((num_outputs, tb), lambda i: (0, i)),
        compiler_params=pltpu.CompilerParams(
            # Independent batch tiles -> shard across the 2 TCs on v7x.
            dimension_semantics=("parallel",),
        ),
    )(tt, w1, b1, w2, b2)

    return out_t.T                              # (B, num_outputs)


def init_params(key, n, num_outputs, hidden=16, dtype=jnp.float32):
    # PyTorch nn.Linear default init: U(-1/sqrt(fan_in), 1/sqrt(fan_in)), PyTorch weight layout.
    k1, k2, k3, k4 = jax.random.split(key, 4)
    bound1 = 1.0 / jnp.sqrt(n)
    bound2 = 1.0 / jnp.sqrt(hidden)
    w1 = jax.random.uniform(k1, (hidden, n), dtype, -bound1, bound1)
    b1 = jax.random.uniform(k2, (hidden, 1), dtype, -bound1, bound1)
    w2 = jax.random.uniform(k3, (num_outputs, hidden), dtype, -bound2, bound2)
    b2 = jax.random.uniform(k4, (num_outputs, 1), dtype, -bound2, bound2)
    return w1, b1, w2, b2


def ref_forward(t, w1, b1, w2, b2):
    # Plain-JAX reference, identical math to the PyTorch forward.
    h = jnp.maximum(t @ w1.T + b1.T, 0.0)
    return h @ w2.T + b2.T


if __name__ == "__main__":
    key = jax.random.PRNGKey(0)
    B, n, num_outputs = 512, 4, 3

    k_in, k_par = jax.random.split(key)
    t = jax.random.normal(k_in, (B, n), jnp.float32)
    w1, b1, w2, b2 = init_params(k_par, n, num_outputs)
    ref = ref_forward(t, w1, b1, w2, b2)

    # Multi-tile path (B=512 -> tb=256, grid of 2: exercises the megacore-friendly split).
    out = jax.block_until_ready(trunk_net(t, w1, b1, w2, b2))
    assert out.shape == (B, num_outputs)
    assert jnp.allclose(out, ref, atol=1e-5, rtol=1e-5)

    # Small-batch / single-block path (tb == B, grid of 1).
    out_small = jax.block_until_ready(trunk_net(t[:8], w1, b1, w2, b2))
    assert jnp.allclose(out_small, ref[:8], atol=1e-5, rtol=1e-5)

    # Ragged batch (B not a multiple of the 128-lane tile): partial last tile writeback.
    out_ragged = jax.block_until_ready(trunk_net(t[:300], w1, b1, w2, b2))
    assert jnp.allclose(out_ragged, ref[:300], atol=1e-5, rtol=1e-5)

    # bf16 streaming path (halves input HBM traffic); looser tolerance vs the f32 reference.
    out_bf16 = jax.block_until_ready(trunk_net(t, w1, b1, w2, b2, stream_dtype=jnp.bfloat16))
    assert jnp.allclose(out_bf16, ref, atol=2e-2, rtol=2e-2)

    print("KERNEL_OK")
</pallas_src>

<mosaic_0001>
module attributes {stable_mosaic.version = 11 : i64} {
  func.func @trunk_kernel(%arg0: i32, %arg1: memref<4x256xf32, #tpu.memory_space<vmem>>, %arg2: memref<16x4xf32, #tpu.memory_space<vmem>>, %arg3: memref<16x1xf32, #tpu.memory_space<vmem>>, %arg4: memref<3x16xf32, #tpu.memory_space<vmem>>, %arg5: memref<3x1xf32, #tpu.memory_space<vmem>>, %arg6: memref<3x256xf32, #tpu.memory_space<vmem>>) attributes {dimension_semantics = [#tpu.dimension_semantics<parallel>], iteration_bounds = array<i64: 2>, scalar_prefetch = 0 : i64, scratch_operands = 0 : i64, tpu.core_type = #tpu.core_type<tc>, window_params = [{transform_indices = @transform_0, window_bounds = array<i64: 4, 256>}, {pipeline_mode = #tpu.pipeline_mode<synchronous>, transform_indices = @transform_1, window_bounds = array<i64: 16, 4>}, {pipeline_mode = #tpu.pipeline_mode<synchronous>, transform_indices = @transform_2, window_bounds = array<i64: 16, 1>}, {pipeline_mode = #tpu.pipeline_mode<synchronous>, transform_indices = @transform_3, window_bounds = array<i64: 3, 16>}, {pipeline_mode = #tpu.pipeline_mode<synchronous>, transform_indices = @transform_4, window_bounds = array<i64: 3, 1>}, {transform_indices = @transform_5, window_bounds = array<i64: 3, 256>}]} {
    %c0 = arith.constant 0 : index
    %c0_0 = arith.constant 0 : index
    %0 = vector.load %arg1[%c0, %c0_0] : memref<4x256xf32, #tpu.memory_space<vmem>>, vector<4x256xf32>
    %c0_1 = arith.constant 0 : index
    %c0_2 = arith.constant 0 : index
    %1 = vector.load %arg2[%c0_1, %c0_2] : memref<16x4xf32, #tpu.memory_space<vmem>>, vector<16x4xf32>
    %cst = arith.constant dense<0.000000e+00> : vector<16x256xf32>
    %2 = tpu.matmul %1, %0, %cst {dimension_numbers = #tpu.dot_dimension_numbers<[1], [0], [0], [1], [0, 0, 1, 1], [], []>} : vector<16x4xf32>, vector<4x256xf32>, vector<16x256xf32> -> vector<16x256xf32>
    %c0_3 = arith.constant 0 : index
    %c0_4 = arith.constant 0 : index
    %3 = vector.load %arg3[%c0_3, %c0_4] : memref<16x1xf32, #tpu.memory_space<vmem>>, vector<16x1xf32>
    %4 = vector.broadcast %3 : vector<16x1xf32> to vector<16x256xf32>
    %5 = arith.addf %2, %4 : vector<16x256xf32>
    %cst_5 = arith.constant 0.000000e+00 : f32
    %6 = vector.broadcast %cst_5 : f32 to vector<16x256xf32>
    %7 = arith.maximumf %5, %6 : vector<16x256xf32>
    %c0_6 = arith.constant 0 : index
    %c0_7 = arith.constant 0 : index
    %8 = vector.load %arg4[%c0_6, %c0_7] : memref<3x16xf32, #tpu.memory_space<vmem>>, vector<3x16xf32>
    %cst_8 = arith.constant dense<0.000000e+00> : vector<3x256xf32>
    %9 = tpu.matmul %8, %7, %cst_8 {dimension_numbers = #tpu.dot_dimension_numbers<[1], [0], [0], [1], [0, 0, 1, 1], [], []>} : vector<3x16xf32>, vector<16x256xf32>, vector<3x256xf32> -> vector<3x256xf32>
    %c0_9 = arith.constant 0 : index
    %c0_10 = arith.constant 0 : index
    %10 = vector.load %arg5[%c0_9, %c0_10] : memref<3x1xf32, #tpu.memory_space<vmem>>, vector<3x1xf32>
    %11 = vector.broadcast %10 : vector<3x1xf32> to vector<3x256xf32>
    %12 = arith.addf %9, %11 : vector<3x256xf32>
    %c0_11 = arith.constant 0 : index
    %c0_12 = arith.constant 0 : index
    %13 = vector.load %arg6[%c0_11, %c0_12] : memref<3x256xf32, #tpu.memory_space<vmem>>, vector<3x256xf32>
    tpu.vector_store %arg6[%c0_11, %c0_12], %12 {strides = array<i32>} : memref<3x256xf32, #tpu.memory_space<vmem>>, vector<3x256xf32>,
    return
  }
  func.func @transform_0(%arg0: i32) -> (i32, i32) {
    %c0_i32 = arith.constant 0 : i32
    %c0_i32_0 = arith.constant 0 : i32
    return %c0_i32, %arg0 : i32, i32
  }
  func.func @transform_1(%arg0: i32) -> (i32, i32) {
    %c0_i32 = arith.constant 0 : i32
    %c0_i32_0 = arith.constant 0 : i32
    %c0_i32_1 = arith.constant 0 : i32
    return %c0_i32, %c0_i32_0 : i32, i32
  }
  func.func @transform_2(%arg0: i32) -> (i32, i32) {
    %c0_i32 = arith.constant 0 : i32
    %c0_i32_0 = arith.constant 0 : i32
    %c0_i32_1 = arith.constant 0 : i32
    return %c0_i32, %c0_i32_0 : i32, i32
  }
  func.func @transform_3(%arg0: i32) -> (i32, i32) {
    %c0_i32 = arith.constant 0 : i32
    %c0_i32_0 = arith.constant 0 : i32
    %c0_i32_1 = arith.constant 0 : i32
    return %c0_i32, %c0_i32_0 : i32, i32
  }
  func.func @transform_4(%arg0: i32) -> (i32, i32) {
    %c0_i32 = arith.constant 0 : i32
    %c0_i32_0 = arith.constant 0 : i32
    %c0_i32_1 = arith.constant 0 : i32
    return %c0_i32, %c0_i32_0 : i32, i32
  }
  func.func @transform_5(%arg0: i32) -> (i32, i32) {
    %c0_i32 = arith.constant 0 : i32
    %c0_i32_0 = arith.constant 0 : i32
    return %c0_i32, %arg0 : i32, i32
  }
}

</mosaic_0001>

<llo_original>
// kernel: tpu_custom_call.1
$region0: #{tpu_custom_call.1}
  #allocation0 [shape = 'u32[]', space=smem, size = 0x4, offset = 0x4, fixed_abs, tag = 'smem constant byte address 0x4 - core index']
  #allocation1 [shape = 'u32[144,128]{1,0:T(1,128)}', space=vmem, size = 0x12000, scoped, tag = 'internal scratch']
  %s0 = inlined_call_operand.vmem [shape: f32[4,512], index: 0, kind: input, shape index: {}]
  %s1 = inlined_call_operand.vmem [shape: f32[16,4], index: 1, kind: input, shape index: {}]
  %s2 = inlined_call_operand.vmem [shape: f32[16,1], index: 2, kind: input, shape index: {}]
  %s3 = inlined_call_operand.vmem [shape: f32[3,16], index: 3, kind: input, shape index: {}]
  %s4 = inlined_call_operand.vmem [shape: f32[3,1], index: 4, kind: input, shape index: {}]
  %s5 = inlined_call_operand.hbm [shape: f32[3,512], index: 5, kind: output, shape index: {}]
  %s6 = sld [smem:[#allocation0]]
  $region53: #{tpu_custom_call.1} parent=0
    _
  %s8 = ssub.s32 1, %s6
  %s9 = scalar_select 0, %s8, %s6
  $region1: #{tpu_custom_call.1} parent=0
    #allocation2 [shape = 'u8[8192]{0}', space=vmem, size = 0x2000, scoped, tag = 'output window, operand 0']
    #allocation3 [shape = 's32[2]{0}', space=sflag, size = 0x8, scoped, tag = 'scoped memory for tpu_custom_call.1']
    %10 = vsyncpa [#allocation3], 0
    %s11 = scalar_lea.sflag [#allocation3], 1
    %12 = vsyncpa %s11, 0
    loop: start=0, step=1, limit=4
    $region2: #{tpu_custom_call.1} parent=1 // loop_pre_header
      _
    $region3: #{tpu_custom_call.1} parent=1 // loop_header
      %s14 = sphi 0, %s18
      %p15 = scmp.ge.s32.totalorder %s14, 4
      %s24 = sphi 0, %s26
      %s27 = sphi 0, %s24
      %s28 = sphi 0, %s27
      %s44 = sphi 0, %s28
      %s48 = sphi 0, %s48
      %s50 = sphi 0, %s48
      %s51 = sphi 0, %s50
      %s65 = sphi 0, %s51
      %s69 = sphi 0, %s69
      %s71 = sphi 0, %s69
      %s72 = sphi 0, %s71
      %s86 = sphi 0, %s72
      %s90 = sphi 0, %s90
      %s92 = sphi 0, %s90
      %s93 = sphi 0, %s92
      %s107 = sphi 0, %s93
      %s111 = sphi 0, %s111
      %s113 = sphi 0, %s111
      %s114 = sphi 0, %s113
      %s128 = sphi 0, %s114
      %s134 = sphi 0, %s136
      %s137 = sphi 0, %s134
      %s138 = sphi 0, %s137
      %s154 = sphi 0, %s138
    $region4: #{tpu_custom_call.1} parent=1 // loop_header_branch
      %17 = sbr.rel (%p15) target = $region8
    $region5: #{tpu_custom_call.1} parent=1 // loop_body
      %s19 = ssub.s32 %s14, 1
      %s20 = ssub.s32 %s14, 2
      %s21 = sadd.s32 %s14, 1
      %s22 = ssub.s32 %s14, %s21
      %p23 = scmp.eq.s32.totalorder %s22, 0
      %s25 = sadd.s32 %s24, 1
      %s26 = scalar_select %p23, %s24, %s25
      %p29 = pneg %p23
      %p30 = scmp.eq.s32.totalorder %s14, 1
      %p31 = por %p29, %p30
      %p32 = scmp.ne.s32.totalorder %s24, %s27
      %p33 = scmp.eq.s32.totalorder %s14, 0
      %p34 = por %p32, %p33
      %p35 = scmp.ne.s32.totalorder %s24, %s27
      %p36 = scmp.eq.s32.totalorder %s19, 1
      %p37 = por %p35, %p36
      %p38 = scmp.ne.s32.totalorder %s27, %s28
      %p39 = scmp.eq.s32.totalorder %s19, 0
      %p40 = por %p38, %p39
      %p41 = scmp.ne.s32.totalorder %s27, %s28
      %p42 = scmp.eq.s32.totalorder %s20, 1
      %p43 = por %p41, %p42
      %p45 = scmp.ne.s32.totalorder %s28, %s44
      %p46 = scmp.eq.s32.totalorder %s20, 0
      %p47 = por %p45, %p46
      %s49 = sadd.s32 %s48, 1
      %p52 = scmp.eq.s32.totalorder %s14, 1
      %p53 = scmp.ne.s32.totalorder %s48, %s50
      %p54 = scmp.eq.s32.totalorder %s14, 0
      %p55 = por %p53, %p54
      %p56 = scmp.ne.s32.totalorder %s48, %s50
      %p57 = scmp.eq.s32.totalorder %s19, 1
      %p58 = por %p56, %p57
      %p59 = scmp.ne.s32.totalorder %s50, %s51
      %p60 = scmp.eq.s32.totalorder %s19, 0
      %p61 = por %p59, %p60
      %p62 = scmp.ne.s32.totalorder %s50, %s51
      %p63 = scmp.eq.s32.totalorder %s20, 1
      %p64 = por %p62, %p63
      %p66 = scmp.ne.s32.totalorder %s51, %s65
      %p67 = scmp.eq.s32.totalorder %s20, 0
      %p68 = por %p66, %p67
      %s70 = sadd.s32 %s69, 1
      %p73 = scmp.eq.s32.totalorder %s14, 1
      %p74 = scmp.ne.s32.totalorder %s69, %s71
      %p75 = scmp.eq.s32.totalorder %s14, 0
      %p76 = por %p74, %p75
      %p77 = scmp.ne.s32.totalorder %s69, %s71
      %p78 = scmp.eq.s32.totalorder %s19, 1
      %p79 = por %p77, %p78
      %p80 = scmp.ne.s32.totalorder %s71, %s72
      %p81 = scmp.eq.s32.totalorder %s19, 0
      %p82 = por %p80, %p81
      %p83 = scmp.ne.s32.totalorder %s71, %s72
      %p84 = scmp.eq.s32.totalorder %s20, 1
      %p85 = por %p83, %p84
      %p87 = scmp.ne.s32.totalorder %s72, %s86
      %p88 = scmp.eq.s32.totalorder %s20, 0
      %p89 = por %p87, %p88
      %s91 = sadd.s32 %s90, 1
      %p94 = scmp.eq.s32.totalorder %s14, 1
      %p95 = scmp.ne.s32.totalorder %s90, %s92
      %p96 = scmp.eq.s32.totalorder %s14, 0
      %p97 = por %p95, %p96
      %p98 = scmp.ne.s32.totalorder %s90, %s92
      %p99 = scmp.eq.s32.totalorder %s19, 1
      %p100 = por %p98, %p99
      %p101 = scmp.ne.s32.totalorder %s92, %s93
      %p102 = scmp.eq.s32.totalorder %s19, 0
      %p103 = por %p101, %p102
      %p104 = scmp.ne.s32.totalorder %s92, %s93
      %p105 = scmp.eq.s32.totalorder %s20, 1
      %p106 = por %p104, %p105
      %p108 = scmp.ne.s32.totalorder %s93, %s107
      %p109 = scmp.eq.s32.totalorder %s20, 0
      %p110 = por %p108, %p109
      %s112 = sadd.s32 %s111, 1
      %p115 = scmp.eq.s32.totalorder %s14, 1
      %p116 = scmp.ne.s32.totalorder %s111, %s113
      %p117 = scmp.eq.s32.totalorder %s14, 0
      %p118 = por %p116, %p117
      %p119 = scmp.ne.s32.totalorder %s111, %s113
      %p120 = scmp.eq.s32.totalorder %s19, 1
      %p121 = por %p119, %p120
      %p122 = scmp.ne.s32.totalorder %s113, %s114
      %p123 = scmp.eq.s32.totalorder %s19, 0
      %p124 = por %p122, %p123
      %p125 = scmp.ne.s32.totalorder %s113, %s114
      %p126 = scmp.eq.s32.totalorder %s20, 1
      %p127 = por %p125, %p126
      %p129 = scmp.ne.s32.totalorder %s114, %s128
      %p130 = scmp.eq.s32.totalorder %s20, 0
      %p131 = por %p129, %p130
      %s132 = ssub.s32 %s14, %s21
      %p133 = scmp.eq.s32.totalorder %s132, 0
      %s135 = sadd.s32 %s134, 1
      %s136 = scalar_select %p133, %s134, %s135
      %p139 = pneg %p133
      %p140 = scmp.eq.s32.totalorder %s14, 1
      %p141 = por %p139, %p140
      %p142 = scmp.ne.s32.totalorder %s134, %s137
      %p143 = scmp.eq.s32.totalorder %s14, 0
      %p144 = por %p142, %p143
      %p145 = scmp.ne.s32.totalorder %s134, %s137
      %p146 = scmp.eq.s32.totalorder %s19, 1
      %p147 = por %p145, %p146
      %p148 = scmp.ne.s32.totalorder %s137, %s138
      %p149 = scmp.eq.s32.totalorder %s19, 0
      %p150 = por %p148, %p149
      %p151 = scmp.ne.s32.totalorder %s137, %s138
      %p152 = scmp.eq.s32.totalorder %s20, 1
      %p153 = por %p151, %p152
      %p155 = scmp.ne.s32.totalorder %s138, %s154
      %p156 = scmp.eq.s32.totalorder %s20, 0
      %p157 = por %p155, %p156
      %p158 = scmp.le.s32.totalorder 1, %s14
      %p159 = scmp.lt.s32.totalorder %s14, 3
      %p160 = pnand %p158, %p159
      %p161 = pneg %p160
      // Predicated region
      $region9: #{tpu_custom_call.1} parent=5 // pred_check
        _
      $region10: #{tpu_custom_call.1} parent=5 // pred_check_branch
        %163 = sbr.rel (%p160) target = $region12
      $region11: #{tpu_custom_call.1} parent=5 // pred_region
        %s164 = ssub.s32 %s14, 1
        // Predicated region
        $region13: #{tpu_custom_call.1} parent=11 // pred_check
          %p165 = pneg %p61
        $region14: #{tpu_custom_call.1} parent=11 // pred_check_branch
          %167 = sbr.rel (%p165) target = $region16
        $region15: #{tpu_custom_call.1} parent=11 // pred_region
          _
        $region16: #{tpu_custom_call.1} parent=11 // pred_fallthru
          _
        // Predicated region
        $region17: #{tpu_custom_call.1} parent=11 // pred_check
          %p168 = pneg %p82
        $region18: #{tpu_custom_call.1} parent=11 // pred_check_branch
          %170 = sbr.rel (%p168) target = $region20
        $region19: #{tpu_custom_call.1} parent=11 // pred_region
          _
        $region20: #{tpu_custom_call.1} parent=11 // pred_fallthru
          _
        // Predicated region
        $region21: #{tpu_custom_call.1} parent=11 // pred_check
          %p171 = pneg %p103
        $region22: #{tpu_custom_call.1} parent=11 // pred_check_branch
          %173 = sbr.rel (%p171) target = $region24
        $region23: #{tpu_custom_call.1} parent=11 // pred_region
          _
        $region24: #{tpu_custom_call.1} parent=11 // pred_fallthru
          _
        // Predicated region
        $region25: #{tpu_custom_call.1} parent=11 // pred_check
          %p174 = pneg %p124
        $region26: #{tpu_custom_call.1} parent=11 // pred_check_branch
          %176 = sbr.rel (%p174) target = $region28
        $region27: #{tpu_custom_call.1} parent=11 // pred_region
          _
        $region28: #{tpu_custom_call.1} parent=11 // pred_fallthru
          _
      $region12: #{tpu_custom_call.1} parent=5 // pred_fallthru
        _
      %p177 = scmp.lt.s32.totalorder %s14, 2
      // Predicated region
      $region29: #{tpu_custom_call.1} parent=5 // pred_check
        %p178 = pneg %p177
      $region30: #{tpu_custom_call.1} parent=5 // pred_check_branch
        %180 = sbr.rel (%p178) target = $region32
      $region31: #{tpu_custom_call.1} parent=5 // pred_region
        // Predicated region
        $region33: #{tpu_custom_call.1} parent=31 // pred_check
          %p181 = pneg %p34
        $region34: #{tpu_custom_call.1} parent=31 // pred_check_branch
          %183 = sbr.rel (%p181) target = $region36
        $region35: #{tpu_custom_call.1} parent=31 // pred_region
          %s184 = smul.u32 2, %s14
          %p185 = scmp.lt.s32.totalorder %s184, 3
          %s186 = scalar_select %p185, %s184, 3
          %s187 = smul.addr %s186, 4
          %s188 = scalar_lea.vmem %s0, %s187
          %s189 = smul.u32 2, %s14
        $region36: #{tpu_custom_call.1} parent=31 // pred_fallthru
          _
      $region32: #{tpu_custom_call.1} parent=5 // pred_fallthru
        _
      %p190 = scmp.le.s32.totalorder 1, %s14
      %p191 = scmp.lt.s32.totalorder %s14, 3
      %p192 = pnand %p190, %p191
      %p193 = pneg %p192
      // Predicated region
      $region37: #{tpu_custom_call.1} parent=5 // pred_check
        _
      $region38: #{tpu_custom_call.1} parent=5 // pred_check_branch
        %195 = sbr.rel (%p192) target = $region40
      $region39: #{tpu_custom_call.1} parent=5 // pred_region
        %s196 = ssub.s32 %s14, 1
        %s197 = smul.u32 2, %s19
        %p198 = scmp.lt.s32.totalorder %s197, 3
        %s199 = scalar_select %p198, %s197, 3
        %s200 = smul.addr %s199, 4
        %s201 = scalar_lea.vmem %s0, %s200
        %p202 = pneg %p40
        %p203 = pneg %p37
        %p204 = pneg %p61
        %p205 = pneg %p58
        %p206 = pneg %p82
        %p207 = pneg %p79
        %p208 = pneg %p103
        %p209 = pneg %p100
        %p210 = pneg %p124
        %p211 = pneg %p121
        %p212 = pneg %p150
        %p213 = pneg %p147
        %s214 = sand.u32 %s137, 1
        %s215 = scalar_lea.sflag [#allocation3], %s214
        %s216 = sand.u32 %s137, 1
        %s217 = smul.addr %s216, 8
        %s218 = scalar_lea.vmem [#allocation2], %s217
        %s219 = smul.u32 2, %s19
        %p220 = scmp.lt.s32.totalorder %s219, 3
        %s221 = scalar_select %p220, %s219, 3
        %s222 = smul.addr %s221, 4
        %s223 = scalar_lea.vmem %s0, %s222
        %s224 = smul.u32 2, %s19
        %s225 = smul.u32 2, %s19
        %v226 = vld [vmem:[%s223] sm:$0xff]
        %v227 = vld [vmem:[%s1] sm:$0xff]
        %v228 = vld [vmem:[%s1 + $0x8] sm:$0xff]
        %v229 = vld [vmem:[%s2] sm:$0xff]
        %v230 = vld [vmem:[%s2 + $0x8] sm:$0xff]
        %232 = vset.pattern.permute.xlu0 0
        %233 = vperm.xlu0 %232, %v229
        %v234 = vpop.permute.xlu0 %233
        %237 = vset.pattern.permute.xlu0 0
        %238 = vperm.xlu0 %237, %v230
        %v239 = vpop.permute.xlu0 %238
        %v242 = vcombine.high %v226, %v226
        %vm243 = vcmask 31744
        %v245 = vsel %vm243, %v227, 0
        %v248 = vsel %vm243, %v228, 0
        %vm250 = vcmask 1043456
        %v251 = vsel %vm250, %v226, 0
        %v253 = vsel %vm250, %v242, 0
        %255 = vmatprep.subr.mxu0 %v253
        %256 = vmatpush1.msra.mxu0 %v251
        %257 = vmatprep.subr.mxu0 0.0
        %258 = vmatpush1.msra.mxu0 0.0
        %259 = vmatprep.subr.mxu0 0.0
        %260 = vmatpush1.msra.mxu0 0.0
        %261 = vmatprep.subr.mxu0 0.0
        %262 = vmatpush1.msra.mxu0 0.0
        %263 = vmatprep.subr.mxu0 0.0
        %264 = vmatpush1.msra.mxu0 0.0
        %265 = vmatprep.subr.mxu0 0.0
        %266 = vmatpush1.msra.mxu0 0.0
        %267 = vmatprep.subr.mxu0 0.0
        %268 = vmatpush1.msra.mxu0 0.0
        %269 = vmatprep.subr.mxu0 0.0
        %270 = vmatpush1.msra.mxu0 0.0
        %271 = vmatprep.subr.mxu0 0.0
        %272 = vmatpush1.msra.mxu0 0.0
        %273 = vmatprep.subr.mxu0 0.0
        %274 = vmatpush1.msra.mxu0 0.0
        %275 = vmatprep.subr.mxu0 0.0
        %276 = vmatpush1.msra.mxu0 0.0
        %277 = vmatprep.subr.mxu0 0.0
        %278 = vmatpush1.msra.mxu0 0.0
        %279 = vmatprep.subr.mxu0 0.0
        %280 = vmatpush1.msra.mxu0 0.0
        %281 = vmatprep.subr.mxu0 0.0
        %282 = vmatpush1.msra.mxu0 0.0
        %283 = vmatprep.subr.mxu0 0.0
        %284 = vmatpush1.msra.mxu0 0.0
        %285 = vmatprep.subr.mxu0 0.0
        %286 = vmatpush1.msra.mxu0 0.0
        %287 = vmatprep.subr.mxu0 0.0
        %288 = vmatpush1.msra.mxu0 0.0
        %289 = vmatprep.subr.mxu0 0.0
        %290 = vmatpush1.msra.mxu0 0.0
        %291 = vmatprep.subr.mxu0 0.0
        %292 = vmatpush1.msra.mxu0 0.0
        %293 = vmatprep.subr.mxu0 0.0
        %294 = vmatpush1.msra.mxu0 0.0
        %295 = vmatprep.subr.mxu0 0.0
        %296 = vmatpush1.msra.mxu0 0.0
        %297 = vmatprep.subr.mxu0 0.0
        %298 = vmatpush1.msra.mxu0 0.0
        %299 = vmatprep.subr.mxu0 0.0
        %300 = vmatpush1.msra.mxu0 0.0
        %301 = vmatprep.subr.mxu0 0.0
        %302 = vmatpush1.msra.mxu0 0.0
        %303 = vmatprep.subr.mxu0 0.0
        %304 = vmatpush1.msra.mxu0 0.0
        %305 = vmatprep.subr.mxu0 0.0
        %306 = vmatpush1.msra.mxu0 0.0
        %307 = vmatprep.subr.mxu0 0.0
        %308 = vmatpush1.msra.mxu0 0.0
        %309 = vmatprep.subr.mxu0 0.0
        %310 = vmatpush1.msra.mxu0 0.0
        %311 = vmatprep.subr.mxu0 0.0
        %312 = vmatpush1.msra.mxu0 0.0
        %313 = vmatprep.subr.mxu0 0.0
        %314 = vmatpush1.msra.mxu0 0.0
        %315 = vmatprep.subr.mxu0 0.0
        %316 = vmatpush1.msra.mxu0 0.0
        %317 = vmatprep.subr.mxu0 0.0
        %318 = vmatpush1.msra.mxu0 0.0
        %319 = vmatprep.mubr.f32.mxu0 0.0
        %320 = vmatmul.mubr.f32.gmra.mrb[0].mxu0 %v245
        %v321 = vpop.f32.mrb[0].mxu0
        %v322 = vadd.f32 %v234, %v321
        %v323 = vpop.f32.mrb[0].mxu0
        %v324 = vadd.f32 %v234, %v323
        %325 = vmatprep.mubr.f32.mxu0 0.0
        %326 = vmatmul.mubr.f32.gmra.mrb[0].mxu0 %v248
        %v327 = vpop.f32.mrb[0].mxu0
        %v328 = vadd.f32 %v239, %v327
        %v329 = vpop.f32.mrb[0].mxu0
        %v330 = vadd.f32 %v239, %v329
        %331 = vdwg.mxu0
        %v332 = vmax.f32 %v322, 0.0
        %v333 = vmax.f32 %v324, 0.0
        %v334 = vmax.f32 %v328, 0.0
        %v335 = vmax.f32 %v330, 0.0
        %v336 = vld [vmem:[%s3] sm:$0x7]
        %v337 = vld [vmem:[%s4] sm:$0x7]
        %339 = vset.pattern.permute.xlu0 0
        %340 = vperm.xlu0 %339, %v337
        %v341 = vpop.permute.xlu0 %340
        %vm343 = vcmask 130048
        %v345 = vsel %vm343, %v336, 0
        %347 = vmatprep.subr.mxu0 %v333
        %348 = vmatpush1.msra.mxu0 %v332
        %349 = vmatprep.subr.mxu0 %v335
        %350 = vmatpush1.msra.mxu0 %v334
        %351 = vmatprep.subr.mxu0 0.0
        %352 = vmatpush1.msra.mxu0 0.0
        %353 = vmatprep.subr.mxu0 0.0
        %354 = vmatpush1.msra.mxu0 0.0
        %355 = vmatprep.subr.mxu0 0.0
        %356 = vmatpush1.msra.mxu0 0.0
        %357 = vmatprep.subr.mxu0 0.0
        %358 = vmatpush1.msra.mxu0 0.0
        %359 = vmatprep.subr.mxu0 0.0
        %360 = vmatpush1.msra.mxu0 0.0
        %361 = vmatprep.subr.mxu0 0.0
        %362 = vmatpush1.msra.mxu0 0.0
        %363 = vmatprep.subr.mxu0 0.0
        %364 = vmatpush1.msra.mxu0 0.0
        %365 = vmatprep.subr.mxu0 0.0
        %366 = vmatpush1.msra.mxu0 0.0
        %367 = vmatprep.subr.mxu0 0.0
        %368 = vmatpush1.msra.mxu0 0.0
        %369 = vmatprep.subr.mxu0 0.0
        %370 = vmatpush1.msra.mxu0 0.0
        %371 = vmatprep.subr.mxu0 0.0
        %372 = vmatpush1.msra.mxu0 0.0
        %373 = vmatprep.subr.mxu0 0.0
        %374 = vmatpush1.msra.mxu0 0.0
        %375 = vmatprep.subr.mxu0 0.0
        %376 = vmatpush1.msra.mxu0 0.0
        %377 = vmatprep.subr.mxu0 0.0
        %378 = vmatpush1.msra.mxu0 0.0
        %379 = vmatprep.subr.mxu0 0.0
        %380 = vmatpush1.msra.mxu0 0.0
        %381 = vmatprep.subr.mxu0 0.0
        %382 = vmatpush1.msra.mxu0 0.0
        %383 = vmatprep.subr.mxu0 0.0
        %384 = vmatpush1.msra.mxu0 0.0
        %385 = vmatprep.subr.mxu0 0.0
        %386 = vmatpush1.msra.mxu0 0.0
        %387 = vmatprep.subr.mxu0 0.0
        %388 = vmatpush1.msra.mxu0 0.0
        %389 = vmatprep.subr.mxu0 0.0
        %390 = vmatpush1.msra.mxu0 0.0
        %391 = vmatprep.subr.mxu0 0.0
        %392 = vmatpush1.msra.mxu0 0.0
        %393 = vmatprep.subr.mxu0 0.0
        %394 = vmatpush1.msra.mxu0 0.0
        %395 = vmatprep.subr.mxu0 0.0
        %396 = vmatpush1.msra.mxu0 0.0
        %397 = vmatprep.subr.mxu0 0.0
        %398 = vmatpush1.msra.mxu0 0.0
        %399 = vmatprep.subr.mxu0 0.0
        %400 = vmatpush1.msra.mxu0 0.0
        %401 = vmatprep.subr.mxu0 0.0
        %402 = vmatpush1.msra.mxu0 0.0
        %403 = vmatprep.subr.mxu0 0.0
        %404 = vmatpush1.msra.mxu0 0.0
        %405 = vmatprep.subr.mxu0 0.0
        %406 = vmatpush1.msra.mxu0 0.0
        %407 = vmatprep.subr.mxu0 0.0
        %408 = vmatpush1.msra.mxu0 0.0
        %409 = vmatprep.subr.mxu0 0.0
        %410 = vmatpush1.msra.mxu0 0.0
        %411 = vmatprep.mubr.f32.mxu0 0.0
        %412 = vmatmul.mubr.f32.gmra.mrb[0].mxu0 %v345
        %v413 = vpop.f32.mrb[0].mxu0
        %v414 = vadd.f32 %v341, %v413
        %v415 = vpop.f32.mrb[0].mxu0
        %v416 = vadd.f32 %v341, %v415
        %417 = vdwg.mxu0
        %v420 = vcombine.low %v414, %v416
        %422 = vst [vmem:[%s218] sm:$0x77] %v420
        %s423 = sand.u32 %s137, 1
        %s424 = scalar_lea.sflag [#allocation3], %s423
        %s425 = sand.u32 %s137, 1
        %s426 = smul.addr %s425, 8
        %s427 = scalar_lea.vmem [#allocation2], %s426
        // Predicated region
        $region41: #{tpu_custom_call.1} parent=39 // pred_check
          %p428 = pneg %p147
        $region42: #{tpu_custom_call.1} parent=39 // pred_check_branch
          %430 = sbr.rel (%p428) target = $region44
        $region43: #{tpu_custom_call.1} parent=39 // pred_region
          %s431 = smul.u32 2, %s19
          %s433 = ssub.s32 128, 128
          %434 = vsyncadd %s424, %s433
          %s435 = smul.addr %s431, 64
          %s436 = scalar_lea.hbm %s5, %s435
          %s438 = sshll.u32 %s427, 4
          %s439 = int_to_ptr.vmem [resolvable:$true] %s438
          %441 = dma.vmem_to_hbm [thread:$0]  %s439, 128, %s436, %s424
        $region44: #{tpu_custom_call.1} parent=39 // pred_fallthru
          _
      $region40: #{tpu_custom_call.1} parent=5 // pred_fallthru
        _
      %p442 = scmp.le.s32.totalorder 2, %s14
      // Predicated region
      $region45: #{tpu_custom_call.1} parent=5 // pred_check
        %p443 = pneg %p442
      $region46: #{tpu_custom_call.1} parent=5 // pred_check_branch
        %445 = sbr.rel (%p443) target = $region48
      $region47: #{tpu_custom_call.1} parent=5 // pred_region
        %s446 = ssub.s32 %s14, 2
        // Predicated region
        $region49: #{tpu_custom_call.1} parent=47 // pred_check
          %p447 = pneg %p153
        $region50: #{tpu_custom_call.1} parent=47 // pred_check_branch
          %449 = sbr.rel (%p447) target = $region52
        $region51: #{tpu_custom_call.1} parent=47 // pred_region
          %s450 = sand.u32 %s138, 1
          %s451 = scalar_lea.sflag [#allocation3], %s450
          %s452 = sand.u32 %s138, 1
          %s453 = smul.addr %s452, 8
          %s454 = scalar_lea.vmem [#allocation2], %s453
          %455 = dma.done %s451, 128
        $region52: #{tpu_custom_call.1} parent=47 // pred_fallthru
          _
      $region48: #{tpu_custom_call.1} parent=5 // pred_fallthru
        _
    $region6: #{tpu_custom_call.1} parent=1 // loop_footer
      %s18 = sadd.s32 1, %s14
    $region7: #{tpu_custom_call.1} parent=1 // loop_footer_branch
      %13 = sbr.rel target = $region3
    $region8: #{tpu_custom_call.1} parent=1 // loop_exit
      _
    %456 = vsyncpa [#allocation3], 1
    %s457 = scalar_lea.sflag [#allocation3], 1
    %458 = vsyncpa %s457, 1

</llo_original>
